<compile_context>
chip_gen: v6e
topology: v6e:2x2x1
jax: 0.10.0
libtpu: 0.0.40
codegen_flags: <defaults>
</compile_context>

<pallas_src>
import functools

import jax
import jax.numpy as jnp
from jax.experimental import pallas as pl
from jax.experimental.pallas import tpu as pltpu


def _conv_bn_lrelu_kernel(x_ref, w_ref, shift_ref, o_ref, *, negative_slope):
    # x_ref:     (1, KKCin, L)   im2col patch tile (L = h_tile * W_out, lane-dense)
    # w_ref:     (Cout, KKCin)   conv weight with BN scale folded in
    # shift_ref: (Cout, 1)       folded BN shift (f32), broadcasts over lanes
    # o_ref:     (1, Cout, L)    output tile (NCHW with spatial flattened -> lane-dense)
    acc = jnp.dot(w_ref[...], x_ref[0], preferred_element_type=jnp.float32)
    y = acc + shift_ref[...]                        # folded BatchNorm2d shift
    y = jnp.where(y >= 0, y, negative_slope * y)    # LeakyReLU(0.1)
    o_ref[0] = y.astype(o_ref.dtype)


def _pick_h_tile(h_out, w_out, kkcin, cout, in_bytes, out_bytes, budget):
    """Largest h_tile dividing h_out with lane-dense blocks that fits VMEM,
    preferring tiles that leave >= 2 grid steps along H for pipelining."""
    divisors = [d for d in range(1, h_out + 1) if h_out % d == 0]
    valid = [d for d in divisors if d == h_out or (d * w_out) % 128 == 0]
    if not valid:
        valid = [h_out]

    def fits(d):
        l = d * w_out
        need = 2 * l * (kkcin * in_bytes + cout * out_bytes)          # dbl-buffered in/out
        need += 2 * cout * (kkcin * in_bytes + 4)                     # weight + shift bufs
        return need <= budget

    for d in sorted(valid, reverse=True):
        if fits(d) and h_out // d >= 2:
            return d
    for d in sorted(valid, reverse=True):
        if fits(d):
            return d
    return min(valid)


def convolutional_layer(x, weight_oihw, gamma, beta, running_mean, running_var,
                        *, stride=1, padding=1, eps=1e-5, negative_slope=0.1,
                        compute_dtype=None, vmem_limit_bytes=48 * 1024 * 1024):
    """NCHW equivalent of ConvolutionalLayer.forward (inference):
    Conv2d(no bias) -> BatchNorm2d (folded) -> LeakyReLU(0.1)."""
    n, cin, h, w = x.shape
    cout, cin_w, kh, kw = weight_oihw.shape
    assert cin == cin_w, (cin, cin_w)
    h_out = (h + 2 * padding - kh) // stride + 1
    w_out = (w + 2 * padding - kw) // stride + 1
    kkcin = kh * kw * cin
    hw = h_out * w_out
    compute_dtype = jnp.dtype(compute_dtype) if compute_dtype is not None else x.dtype

    # ---- Fold BatchNorm2d (inference) into the conv weight + per-channel shift.
    inv_std = 1.0 / jnp.sqrt(running_var.astype(jnp.float32) + eps)
    scale = gamma.astype(jnp.float32) * inv_std                                  # (Cout,)
    shift = (beta.astype(jnp.float32)
             - running_mean.astype(jnp.float32) * scale).reshape(cout, 1)        # (Cout, 1)
    # (Cout, Cin, KH, KW) -> (Cout, KH*KW*Cin), columns ordered (kh, kw, cin).
    w2d = jnp.transpose(weight_oihw.astype(jnp.float32), (0, 2, 3, 1)).reshape(cout, kkcin)
    w_folded = (w2d * scale[:, None]).astype(compute_dtype)

    # ---- im2col (single fused XLA prep pass; absorbs padding and stride).
    x_pad = jnp.pad(x, ((0, 0), (0, 0), (padding, padding), (padding, padding)))
    taps = []
    for i in range(kh):
        for j in range(kw):
            taps.append(x_pad[:, :,
                              i:i + (h_out - 1) * stride + 1:stride,
                              j:j + (w_out - 1) * stride + 1:stride])
    # (N, KH*KW, Cin, H_out, W_out) -> (N, KH*KW*Cin, H_out*W_out)
    patches = jnp.stack(taps, axis=1).reshape(n, kkcin, hw).astype(compute_dtype)

    # ---- Tiling (v7x-safe VMEM budget; >= 2 H steps per core when possible).
    in_bytes = jnp.dtype(compute_dtype).itemsize
    out_bytes = jnp.dtype(x.dtype).itemsize
    h_tile = _pick_h_tile(h_out, w_out, kkcin, cout, in_bytes, out_bytes,
                          budget=int(vmem_limit_bytes * 0.8))
    l_tile = h_tile * w_out
    grid = (n, h_out // h_tile)

    kernel = functools.partial(_conv_bn_lrelu_kernel, negative_slope=negative_slope)

    out = pl.pallas_call(
        kernel,
        out_shape=jax.ShapeDtypeStruct((n, cout, hw), x.dtype),
        grid_spec=pltpu.PrefetchScalarGridSpec(
            num_scalar_prefetch=0,
            grid=grid,
            in_specs=[
                pl.BlockSpec((1, kkcin, l_tile), lambda ni, ti: (ni, 0, ti)),
                pl.BlockSpec((cout, kkcin), lambda ni, ti: (0, 0)),
                pl.BlockSpec((cout, 1), lambda ni, ti: (0, 0)),
            ],
            out_specs=pl.BlockSpec((1, cout, l_tile), lambda ni, ti: (ni, 0, ti)),
        ),
        compiler_params=pltpu.CompilerParams(
            dimension_semantics=("parallel", "parallel"),
            vmem_limit_bytes=vmem_limit_bytes),
    )(patches, w_folded, shift)

    return out.reshape(n, cout, h_out, w_out)


if __name__ == "__main__":
    N, CIN, H, W, COUT, K, PAD = 2, 4, 16, 16, 32, 3, 1

    key = jax.random.PRNGKey(0)
    k1, k2, k3, k4, k5, k6 = jax.random.split(key, 6)
    x = jax.random.normal(k1, (N, CIN, H, W), jnp.float32)                 # NCHW
    w_oihw = 0.1 * jax.random.normal(k2, (COUT, CIN, K, K), jnp.float32)   # OIHW
    gamma = 1.0 + 0.1 * jax.random.normal(k3, (COUT,), jnp.float32)
    beta = 0.1 * jax.random.normal(k4, (COUT,), jnp.float32)
    running_mean = 0.1 * jax.random.normal(k5, (COUT,), jnp.float32)
    running_var = jax.random.uniform(k6, (COUT,), jnp.float32, minval=0.5, maxval=1.5)

    def reference(xx, stride):
        conv = jax.lax.conv_general_dilated(
            xx, w_oihw, window_strides=(stride, stride),
            padding=[(PAD, PAD), (PAD, PAD)],
            dimension_numbers=("NCHW", "OIHW", "NCHW"))
        sc = gamma / jnp.sqrt(running_var + 1e-5)
        y = conv * sc[None, :, None, None] + (beta - running_mean * sc)[None, :, None, None]
        return jnp.where(y >= 0, y, 0.1 * y)

    # stride=1, f32 operands (strict tolerance).
    y1 = jax.block_until_ready(convolutional_layer(
        x, w_oihw, gamma, beta, running_mean, running_var, stride=1, padding=PAD))
    r1 = reference(x, 1)
    assert y1.shape == r1.shape and y1.dtype == x.dtype, (y1.shape, y1.dtype)
    assert bool(jnp.allclose(y1, r1, atol=1e-4, rtol=1e-4)), float(jnp.max(jnp.abs(y1 - r1)))

    # stride=2 (downsampling layer) -- exercised and checked, not just claimed.
    y2 = jax.block_until_ready(convolutional_layer(
        x, w_oihw, gamma, beta, running_mean, running_var, stride=2, padding=PAD))
    r2 = reference(x, 2)
    assert y2.shape == r2.shape, (y2.shape, r2.shape)
    assert bool(jnp.allclose(y2, r2, atol=1e-4, rtol=1e-4)), float(jnp.max(jnp.abs(y2 - r2)))

    # bf16 operand path (2x MXU throughput, half the DMA bytes); f32 accumulate/epilogue.
    y3 = jax.block_until_ready(convolutional_layer(
        x, w_oihw, gamma, beta, running_mean, running_var, stride=1, padding=PAD,
        compute_dtype=jnp.bfloat16))
    assert bool(jnp.allclose(y3, r1, atol=5e-2, rtol=5e-2)), float(jnp.max(jnp.abs(y3 - r1)))

    print("KERNEL_OK")
</pallas_src>

<mosaic_0001>
module attributes {stable_mosaic.version = 11 : i64} {
  func.func @_conv_bn_lrelu_kernel(%arg0: i32, %arg1: i32, %arg2: memref<1x36x128xf32, #tpu.memory_space<vmem>>, %arg3: memref<32x36xf32, #tpu.memory_space<vmem>>, %arg4: memref<32x1xf32, #tpu.memory_space<vmem>>, %arg5: memref<1x32x128xf32, #tpu.memory_space<vmem>>) attributes {dimension_semantics = [#tpu.dimension_semantics<parallel>, #tpu.dimension_semantics<parallel>], iteration_bounds = array<i64: 2, 2>, scalar_prefetch = 0 : i64, scratch_operands = 0 : i64, tpu.core_type = #tpu.core_type<tc>, window_params = [{transform_indices = @transform_0, window_bounds = array<i64: 1, 36, 128>}, {pipeline_mode = #tpu.pipeline_mode<synchronous>, transform_indices = @transform_1, window_bounds = array<i64: 32, 36>}, {pipeline_mode = #tpu.pipeline_mode<synchronous>, transform_indices = @transform_2, window_bounds = array<i64: 32, 1>}, {transform_indices = @transform_3, window_bounds = array<i64: 1, 32, 128>}]} {
    %c0 = arith.constant 0 : index
    %c0_0 = arith.constant 0 : index
    %0 = vector.load %arg3[%c0, %c0_0] : memref<32x36xf32, #tpu.memory_space<vmem>>, vector<32x36xf32>
    %c0_1 = arith.constant 0 : index
    %c0_2 = arith.constant 0 : index
    %c0_3 = arith.constant 0 : index
    %1 = vector.load %arg2[%c0_1, %c0_2, %c0_3] : memref<1x36x128xf32, #tpu.memory_space<vmem>>, vector<1x36x128xf32>
    %2 = vector.shape_cast %1 : vector<1x36x128xf32> to vector<36x128xf32>
    %cst = arith.constant dense<0.000000e+00> : vector<32x128xf32>
    %3 = tpu.matmul %0, %2, %cst {dimension_numbers = #tpu.dot_dimension_numbers<[1], [0], [0], [1], [0, 0, 1, 1], [], []>} : vector<32x36xf32>, vector<36x128xf32>, vector<32x128xf32> -> vector<32x128xf32>
    %c0_4 = arith.constant 0 : index
    %c0_5 = arith.constant 0 : index
    %4 = vector.load %arg4[%c0_4, %c0_5] : memref<32x1xf32, #tpu.memory_space<vmem>>, vector<32x1xf32>
    %5 = vector.broadcast %4 : vector<32x1xf32> to vector<32x128xf32>
    %6 = arith.addf %3, %5 : vector<32x128xf32>
    %cst_6 = arith.constant 0.000000e+00 : f32
    %7 = vector.broadcast %cst_6 : f32 to vector<32x128xf32>
    %8 = arith.cmpf oge, %6, %7 : vector<32x128xf32>
    %cst_7 = arith.constant 1.000000e-01 : f32
    %9 = vector.broadcast %cst_7 : f32 to vector<32x128xf32>
    %10 = arith.mulf %9, %6 : vector<32x128xf32>
    %11 = arith.select %8, %6, %10 : vector<32x128xi1>, vector<32x128xf32>
    %c0_8 = arith.constant 0 : index
    %c0_9 = arith.constant 0 : index
    %c0_10 = arith.constant 0 : index
    %12 = vector.load %arg5[%c0_8, %c0_9, %c0_10] : memref<1x32x128xf32, #tpu.memory_space<vmem>>, vector<1x32x128xf32>
    %13 = vector.shape_cast %12 : vector<1x32x128xf32> to vector<32x128xf32>
    %14 = vector.shape_cast %11 : vector<32x128xf32> to vector<1x32x128xf32>
    tpu.vector_store %arg5[%c0_8, %c0_9, %c0_10], %14 {strides = array<i32>} : memref<1x32x128xf32, #tpu.memory_space<vmem>>, vector<1x32x128xf32>,
    return
  }
  func.func @transform_0(%arg0: i32, %arg1: i32) -> (i32, i32, i32) {
    %c0_i32 = arith.constant 0 : i32
    %c0_i32_0 = arith.constant 0 : i32
    return %arg0, %c0_i32, %arg1 : i32, i32, i32
  }
  func.func @transform_1(%arg0: i32, %arg1: i32) -> (i32, i32) {
    %c0_i32 = arith.constant 0 : i32
    %c0_i32_0 = arith.constant 0 : i32
    %c0_i32_1 = arith.constant 0 : i32
    return %c0_i32, %c0_i32_0 : i32, i32
  }
  func.func @transform_2(%arg0: i32, %arg1: i32) -> (i32, i32) {
    %c0_i32 = arith.constant 0 : i32
    %c0_i32_0 = arith.constant 0 : i32
    %c0_i32_1 = arith.constant 0 : i32
    return %c0_i32, %c0_i32_0 : i32, i32
  }
  func.func @transform_3(%arg0: i32, %arg1: i32) -> (i32, i32, i32) {
    %c0_i32 = arith.constant 0 : i32
    %c0_i32_0 = arith.constant 0 : i32
    return %arg0, %c0_i32, %arg1 : i32, i32, i32
  }
}

</mosaic_0001>

<llo_original>
// kernel: tpu_custom_call.1
$region0: #{tpu_custom_call.1}
  #allocation0 [shape = 'u32[]', space=smem, size = 0x4, offset = 0x4, fixed_abs, tag = 'smem constant byte address 0x4 - core index']
  #allocation1 [shape = 'u32[144,128]{1,0:T(1,128)}', space=vmem, size = 0x12000, scoped, tag = 'internal scratch']
  %s0 = inlined_call_operand.vmem [shape: f32[2,36,256], index: 0, kind: input, shape index: {}]
  %s1 = inlined_call_operand.vmem [shape: f32[32,36], index: 1, kind: input, shape index: {}]
  %s2 = inlined_call_operand.vmem [shape: f32[32,1], index: 2, kind: input, shape index: {}]
  %s3 = inlined_call_operand.hbm [shape: f32[2,32,256], index: 3, kind: output, shape index: {}]
  %s4 = sld [smem:[#allocation0]]
  $region83: #{tpu_custom_call.1} parent=0
    _
  %s6 = ssub.s32 1, %s4
  %s7 = scalar_select 0, %s6, %s4
  $region1: #{tpu_custom_call.1} parent=0
    #allocation2 [shape = 'u8[40960]{0}', space=vmem, size = 0xa000, scoped, tag = 'input window, operand 0']
    #allocation3 [shape = 'u8[32768]{0}', space=vmem, size = 0x8000, scoped, tag = 'output window, operand 0']
    #allocation4 [shape = 's32[2]{0}', space=sflag, size = 0x8, scoped, tag = 'scoped memory for tpu_custom_call.1']
    %8 = vsyncpa [#allocation4], 0
    %s9 = scalar_lea.sflag [#allocation4], 1
    %10 = vsyncpa %s9, 0
    loop: start=0, step=1, limit=6
    $region2: #{tpu_custom_call.1} parent=1 // loop_pre_header
      _
    $region3: #{tpu_custom_call.1} parent=1 // loop_header
      %s12 = sphi 0, %s16
      %p13 = scmp.ge.s32.totalorder %s12, 6
      %s19 = sphi 0, %s31
      %s20 = sphi 0, %s27
      %s21 = sphi 0, %s19
      %s22 = sphi 0, %s20
      %s23 = sphi 0, %s21
      %s24 = sphi 0, %s22
      %s36 = sphi 0, %s38
      %s39 = sphi 0, %s36
      %s40 = sphi 0, %s39
      %s56 = sphi 0, %s40
      %s60 = sphi 0, %s60
      %s62 = sphi 0, %s60
      %s63 = sphi 0, %s62
      %s77 = sphi 0, %s63
      %s81 = sphi 0, %s81
      %s83 = sphi 0, %s81
      %s84 = sphi 0, %s83
      %s98 = sphi 0, %s84
      %s106 = sphi 0, %s108
      %s109 = sphi 0, %s106
      %s110 = sphi 0, %s109
      %s126 = sphi 0, %s110
    $region4: #{tpu_custom_call.1} parent=1 // loop_header_branch
      %15 = sbr.rel (%p13) target = $region8
    $region5: #{tpu_custom_call.1} parent=1 // loop_body
      %s17 = ssub.s32 %s12, 1
      %s18 = ssub.s32 %s12, 2
      %s25 = sadd.s32 1, %s20
      %p26 = scmp.ge.s32.totalorder %s25, 2
      %s27 = scalar_select %p26, 0, %s25
      %s28 = sadd.s32 1, %s19
      %s29 = scalar_select %p26, %s28, %s19
      %p30 = scmp.ge.s32.totalorder %s29, 2
      %s31 = scalar_select %p30, 0, %s29
      %s32 = ssub.s32 %s19, %s31
      %s33 = ssub.s32 %s20, %s27
      %s34 = sor.u32 %s32, %s33
      %p35 = scmp.eq.s32.totalorder %s34, 0
      %s37 = sadd.s32 %s36, 1
      %s38 = scalar_select %p35, %s36, %s37
      %p41 = pneg %p35
      %p42 = scmp.eq.s32.totalorder %s12, 3
      %p43 = por %p41, %p42
      %p44 = scmp.ne.s32.totalorder %s36, %s39
      %p45 = scmp.eq.s32.totalorder %s12, 0
      %p46 = por %p44, %p45
      %p47 = scmp.ne.s32.totalorder %s36, %s39
      %p48 = scmp.eq.s32.totalorder %s17, 3
      %p49 = por %p47, %p48
      %p50 = scmp.ne.s32.totalorder %s39, %s40
      %p51 = scmp.eq.s32.totalorder %s17, 0
      %p52 = por %p50, %p51
      %p53 = scmp.ne.s32.totalorder %s39, %s40
      %p54 = scmp.eq.s32.totalorder %s18, 3
      %p55 = por %p53, %p54
      %p57 = scmp.ne.s32.totalorder %s40, %s56
      %p58 = scmp.eq.s32.totalorder %s18, 0
      %p59 = por %p57, %p58
      %s61 = sadd.s32 %s60, 1
      %p64 = scmp.eq.s32.totalorder %s12, 3
      %p65 = scmp.ne.s32.totalorder %s60, %s62
      %p66 = scmp.eq.s32.totalorder %s12, 0
      %p67 = por %p65, %p66
      %p68 = scmp.ne.s32.totalorder %s60, %s62
      %p69 = scmp.eq.s32.totalorder %s17, 3
      %p70 = por %p68, %p69
      %p71 = scmp.ne.s32.totalorder %s62, %s63
      %p72 = scmp.eq.s32.totalorder %s17, 0
      %p73 = por %p71, %p72
      %p74 = scmp.ne.s32.totalorder %s62, %s63
      %p75 = scmp.eq.s32.totalorder %s18, 3
      %p76 = por %p74, %p75
      %p78 = scmp.ne.s32.totalorder %s63, %s77
      %p79 = scmp.eq.s32.totalorder %s18, 0
      %p80 = por %p78, %p79
      %s82 = sadd.s32 %s81, 1
      %p85 = scmp.eq.s32.totalorder %s12, 3
      %p86 = scmp.ne.s32.totalorder %s81, %s83
      %p87 = scmp.eq.s32.totalorder %s12, 0
      %p88 = por %p86, %p87
      %p89 = scmp.ne.s32.totalorder %s81, %s83
      %p90 = scmp.eq.s32.totalorder %s17, 3
      %p91 = por %p89, %p90
      %p92 = scmp.ne.s32.totalorder %s83, %s84
      %p93 = scmp.eq.s32.totalorder %s17, 0
      %p94 = por %p92, %p93
      %p95 = scmp.ne.s32.totalorder %s83, %s84
      %p96 = scmp.eq.s32.totalorder %s18, 3
      %p97 = por %p95, %p96
      %p99 = scmp.ne.s32.totalorder %s84, %s98
      %p100 = scmp.eq.s32.totalorder %s18, 0
      %p101 = por %p99, %p100
      %s102 = ssub.s32 %s19, %s31
      %s103 = ssub.s32 %s20, %s27
      %s104 = sor.u32 %s102, %s103
      %p105 = scmp.eq.s32.totalorder %s104, 0
      %s107 = sadd.s32 %s106, 1
      %s108 = scalar_select %p105, %s106, %s107
      %p111 = pneg %p105
      %p112 = scmp.eq.s32.totalorder %s12, 3
      %p113 = por %p111, %p112
      %p114 = scmp.ne.s32.totalorder %s106, %s109
      %p115 = scmp.eq.s32.totalorder %s12, 0
      %p116 = por %p114, %p115
      %p117 = scmp.ne.s32.totalorder %s106, %s109
      %p118 = scmp.eq.s32.totalorder %s17, 3
      %p119 = por %p117, %p118
      %p120 = scmp.ne.s32.totalorder %s109, %s110
      %p121 = scmp.eq.s32.totalorder %s17, 0
      %p122 = por %p120, %p121
      %p123 = scmp.ne.s32.totalorder %s109, %s110
      %p124 = scmp.eq.s32.totalorder %s18, 3
      %p125 = por %p123, %p124
      %p127 = scmp.ne.s32.totalorder %s110, %s126
      %p128 = scmp.eq.s32.totalorder %s18, 0
      %p129 = por %p127, %p128
      %p130 = scmp.le.s32.totalorder 1, %s12
      %p131 = scmp.lt.s32.totalorder %s12, 5
      %p132 = pnand %p130, %p131
      %p133 = pneg %p132
      // Predicated region
      $region9: #{tpu_custom_call.1} parent=5 // pred_check
        _
      $region10: #{tpu_custom_call.1} parent=5 // pred_check_branch
        %135 = sbr.rel (%p132) target = $region12
      $region11: #{tpu_custom_call.1} parent=5 // pred_region
        %s136 = ssub.s32 %s12, 1
        // Predicated region
        $region13: #{tpu_custom_call.1} parent=11 // pred_check
          %p137 = pneg %p73
        $region14: #{tpu_custom_call.1} parent=11 // pred_check_branch
          %139 = sbr.rel (%p137) target = $region16
        $region15: #{tpu_custom_call.1} parent=11 // pred_region
          _
        $region16: #{tpu_custom_call.1} parent=11 // pred_fallthru
          _
        // Predicated region
        $region17: #{tpu_custom_call.1} parent=11 // pred_check
          %p140 = pneg %p94
        $region18: #{tpu_custom_call.1} parent=11 // pred_check_branch
          %142 = sbr.rel (%p140) target = $region20
        $region19: #{tpu_custom_call.1} parent=11 // pred_region
          _
        $region20: #{tpu_custom_call.1} parent=11 // pred_fallthru
          _
      $region12: #{tpu_custom_call.1} parent=5 // pred_fallthru
        _
      %p143 = scmp.lt.s32.totalorder %s12, 4
      // Predicated region
      $region21: #{tpu_custom_call.1} parent=5 // pred_check
        %p144 = pneg %p143
      $region22: #{tpu_custom_call.1} parent=5 // pred_check_branch
        %146 = sbr.rel (%p144) target = $region24
      $region23: #{tpu_custom_call.1} parent=5 // pred_region
        // Predicated region
        $region25: #{tpu_custom_call.1} parent=23 // pred_check
          %p147 = pneg %p46
        $region26: #{tpu_custom_call.1} parent=23 // pred_check_branch
          %149 = sbr.rel (%p147) target = $region28
        $region27: #{tpu_custom_call.1} parent=23 // pred_region
          %s150 = sand.u32 %s36, 1
          %s151 = sand.u32 %s36, 1
          %s152 = smul.addr %s151, 40
          %s153 = scalar_lea.vmem [#allocation2], %s152
          %s154 = smul.addr %s19, 10
          %s155 = sadd.s32 %s20, %s154
          %s156 = smul.addr %s155, 8
          %s157 = scalar_lea.vmem %s0, %s156
          // Predicated region
          $region29: #{tpu_custom_call.1} parent=27 // pred_check
            _
          $region30: #{tpu_custom_call.1} parent=27 // pred_check_branch
            %159 = sbr.rel (0) target = $region32
          $region31: #{tpu_custom_call.1} parent=27 // pred_region
            // Predicated region
            $region33: #{tpu_custom_call.1} parent=31 // pred_check
              _
            $region34: #{tpu_custom_call.1} parent=31 // pred_check_branch
              %161 = sbr.rel (0) target = $region36
            $region35: #{tpu_custom_call.1} parent=31 // pred_region
              // Predicated region
              $region48: #{tpu_custom_call.1} parent=35 // pred_check
                _
              $region49: #{tpu_custom_call.1} parent=35 // pred_check_branch
                %185 = sbr.rel (0) target = $region51
              $region50: #{tpu_custom_call.1} parent=35 // pred_region
                loop: start=0, step=1, limit=1
                $region52: #{tpu_custom_call.1} parent=50 // loop_pre_header
                  _
                $region53: #{tpu_custom_call.1} parent=50 // loop_header
                  %s187 = sphi 0, %s191
                  %p188 = scmp.ge.s32.totalorder %s187, 1
                  %s192 = sphi %s157, %s157
                  %s193 = sphi %s153, %s153
                $region54: #{tpu_custom_call.1} parent=50 // loop_header_branch
                  %190 = sbr.rel (%p188) target = $region58
                $region55: #{tpu_custom_call.1} parent=50 // loop_body
                  %v194 = vld [vmem:[%s192] sm:$0xff]
                  %195 = vst [vmem:[%s193] sm:$0xff] %v194
                  %v196 = vld [vmem:[%s192 + $0x10] sm:$0xff]
                  %197 = vst [vmem:[%s193 + $0x8] sm:$0xff] %v196
                  %v198 = vld [vmem:[%s192 + $0x20] sm:$0xff]
                  %199 = vst [vmem:[%s193 + $0x10] sm:$0xff] %v198
                  %v200 = vld [vmem:[%s192 + $0x30] sm:$0xff]
                  %201 = vst [vmem:[%s193 + $0x18] sm:$0xff] %v200
                  %v202 = vld [vmem:[%s192 + $0x40] sm:$0xff]
                  %203 = vst [vmem:[%s193 + $0x20] sm:$0xff] %v202
                $region56: #{tpu_custom_call.1} parent=50 // loop_footer
                  %s191 = sadd.s32 1, %s187
                $region57: #{tpu_custom_call.1} parent=50 // loop_footer_branch
                  %186 = sbr.rel target = $region53
                $region58: #{tpu_custom_call.1} parent=50 // loop_exit
                  _
              $region51: #{tpu_custom_call.1} parent=35 // pred_fallthru
                _
              // Predicated region
              $region59: #{tpu_custom_call.1} parent=35 // pred_check
                _
              $region60: #{tpu_custom_call.1} parent=35 // pred_check_branch
                %205 = sbr.rel target = $region62
              $region61: #{tpu_custom_call.1} parent=35 // pred_region
                _
              $region62: #{tpu_custom_call.1} parent=35 // pred_fallthru
                _
            $region36: #{tpu_custom_call.1} parent=31 // pred_fallthru
              _
            // Predicated region
            $region37: #{tpu_custom_call.1} parent=31 // pred_check
              _
            $region38: #{tpu_custom_call.1} parent=31 // pred_check_branch
              %163 = sbr.rel target = $region40
            $region39: #{tpu_custom_call.1} parent=31 // pred_region
              %s165 = ssub.s32 256, 1
              loop: start=0, step=1, limit=1
              $region41: #{tpu_custom_call.1} parent=39 // loop_pre_header
                _
              $region42: #{tpu_custom_call.1} parent=39 // loop_header
                %s167 = sphi 0, %s171
                %p168 = scmp.ge.s32.totalorder %s167, 1
                %s172 = sphi %s157, %s157
                %s173 = sphi %s153, %s153
              $region43: #{tpu_custom_call.1} parent=39 // loop_header_branch
                %170 = sbr.rel (%p168) target = $region47
              $region44: #{tpu_custom_call.1} parent=39 // loop_body
                %v174 = vld [vmem:[%s172] sm:%s165]
                %175 = vst [vmem:[%s173] sm:%s165] %v174
                %v176 = vld [vmem:[%s172 + $0x10] sm:%s165]
                %177 = vst [vmem:[%s173 + $0x8] sm:%s165] %v176
                %v178 = vld [vmem:[%s172 + $0x20] sm:%s165]
                %179 = vst [vmem:[%s173 + $0x10] sm:%s165] %v178
                %v180 = vld [vmem:[%s172 + $0x30] sm:%s165]
                %181 = vst [vmem:[%s173 + $0x18] sm:%s165] %v180
                %v182 = vld [vmem:[%s172 + $0x40] sm:%s165]
                %183 = vst [vmem:[%s173 + $0x20] sm:%s165] %v182
              $region45: #{tpu_custom_call.1} parent=39 // loop_footer
                %s171 = sadd.s32 1, %s167
              $region46: #{tpu_custom_call.1} parent=39 // loop_footer_branch
                %166 = sbr.rel target = $region42
              $region47: #{tpu_custom_call.1} parent=39 // loop_exit
                _
            $region40: #{tpu_custom_call.1} parent=31 // pred_fallthru
              _
          $region32: #{tpu_custom_call.1} parent=27 // pred_fallthru
            _
          %206 = vnop
        $region28: #{tpu_custom_call.1} parent=23 // pred_fallthru
          _
      $region24: #{tpu_custom_call.1} parent=5 // pred_fallthru
        _
      %p207 = scmp.le.s32.totalorder 1, %s12
      %p208 = scmp.lt.s32.totalorder %s12, 5
      %p209 = pnand %p207, %p208
      %p210 = pneg %p209
      // Predicated region
      $region63: #{tpu_custom_call.1} parent=5 // pred_check
        _
      $region64: #{tpu_custom_call.1} parent=5 // pred_check_branch
        %212 = sbr.rel (%p209) target = $region66
      $region65: #{tpu_custom_call.1} parent=5 // pred_region
        %s213 = ssub.s32 %s12, 1
        %s214 = sand.u32 %s39, 1
        %s215 = sand.u32 %s39, 1
        %s216 = smul.addr %s215, 40
        %s217 = scalar_lea.vmem [#allocation2], %s216
        // Predicated region
        $region67: #{tpu_custom_call.1} parent=65 // pred_check
          %p218 = pneg %p52
        $region68: #{tpu_custom_call.1} parent=65 // pred_check_branch
          %220 = sbr.rel (%p218) target = $region70
        $region69: #{tpu_custom_call.1} parent=65 // pred_region
          _
        $region70: #{tpu_custom_call.1} parent=65 // pred_fallthru
          _
        %s221 = sand.u32 %s39, 1
        %s222 = sand.u32 %s39, 1
        %s223 = smul.addr %s222, 40
        %s224 = scalar_lea.vmem [#allocation2], %s223
        %p225 = pneg %p52
        %p226 = pneg %p49
        %p227 = pneg %p73
        %p228 = pneg %p70
        %p229 = pneg %p94
        %p230 = pneg %p91
        %p231 = pneg %p122
        %p232 = pneg %p119
        %s233 = sand.u32 %s109, 1
        %s234 = scalar_lea.sflag [#allocation4], %s233
        %s235 = sand.u32 %s109, 1
        %s236 = smul.addr %s235, 32
        %s237 = scalar_lea.vmem [#allocation3], %s236
        %v238 = vld [vmem:[%s1] sm:$0xff]
        %v239 = vld [vmem:[%s1 + $0x8] sm:$0xff]
        %v240 = vld [vmem:[%s1 + $0x10] sm:$0xff]
        %v241 = vld [vmem:[%s1 + $0x18] sm:$0xff]
        %v242 = vld [vmem:[%s217] sm:$0xff]
        %v243 = vld [vmem:[%s217 + $0x8] sm:$0xff]
        %v244 = vld [vmem:[%s217 + $0x10] sm:$0xff]
        %v245 = vld [vmem:[%s217 + $0x18] sm:$0xff]
        %v246 = vld [vmem:[%s217 + $0x20] sm:$0xf]
        %v247 = vld [vmem:[%s2] sm:$0xff]
        %v248 = vld [vmem:[%s2 + $0x8] sm:$0xff]
        %v249 = vld [vmem:[%s2 + $0x10] sm:$0xff]
        %v250 = vld [vmem:[%s2 + $0x18] sm:$0xff]
        %252 = vset.pattern.permute.xlu0 0
        %253 = vperm.xlu0 %252, %v247
        %v254 = vpop.permute.xlu0 %253
        %257 = vset.pattern.permute.xlu0 0
        %258 = vperm.xlu0 %257, %v248
        %v259 = vpop.permute.xlu0 %258
        %262 = vset.pattern.permute.xlu0 0
        %263 = vperm.xlu0 %262, %v249
        %v264 = vpop.permute.xlu0 %263
        %267 = vset.pattern.permute.xlu0 0
        %268 = vperm.xlu0 %267, %v250
        %v269 = vpop.permute.xlu0 %268
        %vm271 = vcmask 293888
        %v273 = vsel %vm271, %v238, 0
        %v276 = vsel %vm271, %v239, 0
        %v279 = vsel %vm271, %v240, 0
        %v282 = vsel %vm271, %v241, 0
        %vm284 = vcmask 1043456
        %v286 = vsel %vm284, %v246, 0
        %288 = vmatprep.subr.mxu0 0.0
        %289 = vmatpush1.msra.mxu0 0.0
        %290 = vmatprep.subr.mxu0 0.0
        %291 = vmatpush1.msra.mxu0 0.0
        %292 = vmatprep.subr.mxu0 0.0
        %293 = vmatpush1.msra.mxu0 0.0
        %294 = vmatprep.subr.mxu0 0.0
        %295 = vmatpush1.msra.mxu0 0.0
        %296 = vmatprep.subr.mxu0 0.0
        %297 = vmatpush1.msra.mxu0 0.0
        %298 = vmatprep.subr.mxu0 0.0
        %299 = vmatpush1.msra.mxu0 0.0
        %300 = vmatprep.subr.mxu0 0.0
        %301 = vmatpush1.msra.mxu0 0.0
        %302 = vmatprep.subr.mxu0 0.0
        %303 = vmatpush1.msra.mxu0 0.0
        %304 = vmatprep.subr.mxu0 0.0
        %305 = vmatpush1.msra.mxu0 0.0
        %306 = vmatprep.subr.mxu0 0.0
        %307 = vmatpush1.msra.mxu0 0.0
        %308 = vmatprep.subr.mxu0 0.0
        %309 = vmatpush1.msra.mxu0 0.0
        %310 = vmatprep.subr.mxu0 0.0
        %311 = vmatpush1.msra.mxu0 %v286
        %312 = vmatprep.subr.mxu0 0.0
        %313 = vmatpush1.msra.mxu0 %v245
        %314 = vmatprep.subr.mxu0 0.0
        %315 = vmatpush1.msra.mxu0 %v244
        %316 = vmatprep.subr.mxu0 0.0
        %317 = vmatpush1.msra.mxu0 %v243
        %318 = vmatprep.subr.mxu0 0.0
        %319 = vmatpush1.msra.mxu0 %v242
        %320 = vmatprep.subr.mxu0 0.0
        %321 = vmatpush2.msra.mxu0 0.0
        %322 = vmatprep.subr.mxu0 0.0
        %323 = vmatpush2.msra.mxu0 0.0
        %324 = vmatprep.subr.mxu0 0.0
        %325 = vmatpush2.msra.mxu0 0.0
        %326 = vmatprep.subr.mxu0 0.0
        %327 = vmatpush2.msra.mxu0 0.0
        %328 = vmatprep.subr.mxu0 0.0
        %329 = vmatpush2.msra.mxu0 0.0
        %330 = vmatprep.subr.mxu0 0.0
        %331 = vmatpush2.msra.mxu0 0.0
        %332 = vmatprep.subr.mxu0 0.0
        %333 = vmatpush2.msra.mxu0 0.0
        %334 = vmatprep.subr.mxu0 0.0
        %335 = vmatpush2.msra.mxu0 0.0
        %336 = vmatprep.subr.mxu0 0.0
        %337 = vmatpush2.msra.mxu0 0.0
        %338 = vmatprep.subr.mxu0 0.0
        %339 = vmatpush2.msra.mxu0 0.0
        %340 = vmatprep.subr.mxu0 0.0
        %341 = vmatpush2.msra.mxu0 0.0
        %342 = vmatprep.subr.mxu0 0.0
        %343 = vmatpush2.msra.mxu0 0.0
        %344 = vmatprep.subr.mxu0 0.0
        %345 = vmatpush2.msra.mxu0 0.0
        %346 = vmatprep.subr.mxu0 0.0
        %347 = vmatpush2.msra.mxu0 0.0
        %348 = vmatprep.subr.mxu0 0.0
        %349 = vmatpush2.msra.mxu0 0.0
        %350 = vmatprep.subr.mxu0 0.0
        %351 = vmatpush2.msra.mxu0 0.0
        %352 = vmatprep.mubr.f32.mxu0 0.0
        %353 = vmatmul.mubr.f32.gmra.mxu0 %v273
        %v354 = vpop.f32.mrf.mxu0
        %v355 = vadd.f32 %v254, %v354
        %v356 = vpop.f32.mrf.mxu0
        %357 = vmatprep.mubr.f32.mxu0 0.0
        %358 = vmatmul.mubr.f32.gmra.mxu0 %v276
        %v359 = vpop.f32.mrf.mxu0
        %v360 = vadd.f32 %v259, %v359
        %v361 = vpop.f32.mrf.mxu0
        %362 = vmatprep.mubr.f32.mxu0 0.0
        %363 = vmatmul.mubr.f32.gmra.mxu0 %v279
        %v364 = vpop.f32.mrf.mxu0
        %v365 = vadd.f32 %v264, %v364
        %v366 = vpop.f32.mrf.mxu0
        %367 = vmatprep.mubr.f32.mxu0 0.0
        %368 = vmatmul.mubr.f32.gmra.mxu0 %v282
        %v369 = vpop.f32.mrf.mxu0
        %v370 = vadd.f32 %v269, %v369
        %v371 = vpop.f32.mrf.mxu0
        %372 = vdwg.mxu0
        %vm373 = vcmp.ge.f32.partialorder %v355, 0.0
        %vm374 = vcmp.ge.f32.partialorder %v360, 0.0
        %vm375 = vcmp.ge.f32.partialorder %v365, 0.0
        %vm376 = vcmp.ge.f32.partialorder %v370, 0.0
        %v377 = vmul.f32 %v355, 0.1
        %v378 = vmul.f32 %v360, 0.1
        %v379 = vmul.f32 %v365, 0.1
        %v380 = vmul.f32 %v370, 0.1
        %v381 = vsel %vm373, %v355, %v377
        %v382 = vsel %vm374, %v360, %v378
        %v383 = vsel %vm375, %v365, %v379
        %v384 = vsel %vm376, %v370, %v380
        %385 = vst [vmem:[%s237] sm:$0xff] %v381
        %386 = vst [vmem:[%s237 + $0x8] sm:$0xff] %v382
        %387 = vst [vmem:[%s237 + $0x10] sm:$0xff] %v383
        %388 = vst [vmem:[%s237 + $0x18] sm:$0xff] %v384
        %s389 = sand.u32 %s109, 1
        %s390 = scalar_lea.sflag [#allocation4], %s389
        %s391 = sand.u32 %s109, 1
        %s392 = smul.addr %s391, 32
        %s393 = scalar_lea.vmem [#allocation3], %s392
        // Predicated region
        $region71: #{tpu_custom_call.1} parent=65 // pred_check
          %p394 = pneg %p119
        $region72: #{tpu_custom_call.1} parent=65 // pred_check_branch
          %396 = sbr.rel (%p394) target = $region74
        $region73: #{tpu_custom_call.1} parent=65 // pred_region
          %s398 = ssub.s32 512, 512
          %399 = vsyncadd %s390, %s398
          %s400 = smul.addr %s21, 8
          %s401 = sadd.s32 %s22, %s400
          %s402 = smul.addr %s401, 128
          %s403 = scalar_lea.hbm %s3, %s402
          %s404 = sshll.u32 %s393, 4
          %s405 = int_to_ptr.vmem [resolvable:$true] %s404
          %410 = dma.vmem_to_hbm [thread:$0]  %s405, 512, %s403, %s390, 128, 256, 8
        $region74: #{tpu_custom_call.1} parent=65 // pred_fallthru
          _
      $region66: #{tpu_custom_call.1} parent=5 // pred_fallthru
        _
      %p411 = scmp.le.s32.totalorder 2, %s12
      // Predicated region
      $region75: #{tpu_custom_call.1} parent=5 // pred_check
        %p412 = pneg %p411
      $region76: #{tpu_custom_call.1} parent=5 // pred_check_branch
        %414 = sbr.rel (%p412) target = $region78
      $region77: #{tpu_custom_call.1} parent=5 // pred_region
        %s415 = ssub.s32 %s12, 2
        // Predicated region
        $region79: #{tpu_custom_call.1} parent=77 // pred_check
          %p416 = pneg %p125
        $region80: #{tpu_custom_call.1} parent=77 // pred_check_branch
          %418 = sbr.rel (%p416) target = $region82
        $region81: #{tpu_custom_call.1} parent=77 // pred_region
          %s419 = sand.u32 %s110, 1
          %s420 = scalar_lea.sflag [#allocation4], %s419
          %s421 = sand.u32 %s110, 1
          %s422 = smul.addr %s421, 32
          %s423 = scalar_lea.vmem [#allocation3], %s422
          %424 = dma.done %s420, 512
        $region82: #{tpu_custom_call.1} parent=77 // pred_fallthru
          _
      $region78: #{tpu_custom_call.1} parent=5 // pred_fallthru
        _
    $region6: #{tpu_custom_call.1} parent=1 // loop_footer
      %s16 = sadd.s32 1, %s12
    $region7: #{tpu_custom_call.1} parent=1 // loop_footer_branch
      %11 = sbr.rel target = $region3
    $region8: #{tpu_custom_call.1} parent=1 // loop_exit
      _
    %425 = vsyncpa [#allocation4], 1
    %s426 = scalar_lea.sflag [#allocation4], 1
    %427 = vsyncpa %s426, 1

</llo_original>
